<compile_context>
chip_gen: v6e
topology: v6e:2x2x1
jax: 0.10.0
libtpu: 0.0.40
codegen_flags: <defaults>
</compile_context>

<pallas_src>
import jax
import jax.numpy as jnp
from jax.experimental import pallas as pl
from jax.experimental.pallas import tpu as pltpu


def _hard_sigmoid_kernel(x_ref, o_ref):
    x = x_ref[...]
    # relu6(x + 3) / 6 ; stays in the input dtype (weak python scalars).
    o_ref[...] = (jnp.clip(x + 3.0, 0.0, 6.0) / 6.0).astype(o_ref.dtype)


_LANE_CANDIDATES = (4096, 2048, 1024, 512, 256, 128)

# Per-generation target block bytes (double-buffered in/out must fit the
# scoped-VMEM budget; only v7x needs the limit raised explicitly).
_TARGET_BLOCK_BYTES = {
    "v5e": 2 << 20,      # 2 bufs x 2 arrays x 2 MiB = 8 MiB  < 16 MiB default
    "v6e": 4 << 20,      # 2 x 2 x 4 MiB = 16 MiB             < 32 MiB default
    "v7x": 6 << 20,      # (3 in + 2 out) x 6 MiB = 30 MiB    < raised 48 MiB
    "unknown": 2 << 20,  # conservative (v4/v5p/CPU-interpret etc.)
}
_V7X_VMEM_LIMIT = 48 << 20


def _tpu_generation():
    try:
        kind = jax.devices()[0].device_kind.lower()
    except Exception:
        return "unknown"
    if "v5 lite" in kind or "v5e" in kind or "v5lite" in kind:
        return "v5e"
    if "v6" in kind:
        return "v6e"
    if "v7" in kind or "7x" in kind:
        return "v7x"
    return "unknown"


def _choose_layout(n, itemsize, target_block_bytes, want_even_grid):
    """Pick (cols, rows, block_rows) for a lane-dense [rows, cols] slab.

    `n` is guaranteed to be a multiple of 128 by the caller.
    """
    sublane_min = {4: 8, 2: 16, 1: 32}.get(itemsize, 8)
    cols = 128
    for c in _LANE_CANDIDATES:
        if n % c == 0:
            cols = c
            break
    rows = n // cols

    target_rows = max(sublane_min, target_block_bytes // (cols * itemsize))
    if rows <= target_rows:
        block_rows = rows            # full-extent block (always legal)
        steps = 1
    else:
        # Multiple of the packed-dtype sublane minimum -> satisfies (8,128).
        block_rows = max(sublane_min, (target_rows // sublane_min) * sublane_min)
        steps = pl.cdiv(rows, block_rows)

    # v7x megacore: both TensorCores only stream if the (parallel) grid has an
    # even, >=2 step count. Only legal to re-tile rows when rows is a sublane
    # multiple (otherwise the block must equal the full row extent).
    if want_even_grid and rows % sublane_min == 0 and rows >= 2 * sublane_min:
        if steps == 1 or steps % 2 == 1:
            steps = 2 if steps == 1 else steps + 1
            br = pl.cdiv(rows, steps)
            br = ((br + sublane_min - 1) // sublane_min) * sublane_min
            block_rows = min(br, rows)

    return cols, rows, block_rows


def hard_sigmoid_pallas(x, *, donate=False):
    """Elementwise hard-sigmoid on an arbitrarily shaped array."""
    orig_shape = x.shape
    dtype = x.dtype
    n = x.size
    if n == 0:
        return x
    itemsize = jnp.dtype(dtype).itemsize

    gen = _tpu_generation()
    target_block_bytes = _TARGET_BLOCK_BYTES.get(gen, _TARGET_BLOCK_BYTES["unknown"])
    is_v7x = gen == "v7x"

    x_flat = x.reshape(-1)

    # Bulk (multiple of 128) goes through Pallas; the <128-element tail is
    # computed with plain jnp. This keeps HBM traffic at the ideal ~2n bytes
    # instead of the pad+concat+slice path's ~3x.
    tail = n % 128
    bulk_n = n - tail
    if bulk_n == 0:
        # Tiny array: a single jnp pass is already optimal.
        return (jnp.clip(x + 3.0, 0.0, 6.0) / 6.0).astype(dtype)

    cols, rows, block_rows = _choose_layout(bulk_n, itemsize,
                                            target_block_bytes, is_v7x)
    x2d = (x_flat[:bulk_n] if tail else x_flat).reshape(rows, cols)

    grid = (pl.cdiv(rows, block_rows),)

    if is_v7x:
        in_spec = pl.BlockSpec((block_rows, cols), lambda i: (i, 0),
                               pipeline_mode=pl.Buffered(3))
        cparams = pltpu.CompilerParams(
            dimension_semantics=("parallel",),
            vmem_limit_bytes=_V7X_VMEM_LIMIT)
    else:
        in_spec = pl.BlockSpec((block_rows, cols), lambda i: (i, 0))
        cparams = pltpu.CompilerParams(dimension_semantics=("parallel",))

    out2d = pl.pallas_call(
        _hard_sigmoid_kernel,
        out_shape=jax.ShapeDtypeStruct((rows, cols), dtype),
        grid=grid,
        in_specs=[in_spec],
        out_specs=pl.BlockSpec((block_rows, cols), lambda i: (i, 0)),
        compiler_params=cparams,
        cost_estimate=pl.CostEstimate(
            flops=3 * bulk_n, transcendentals=0,
            bytes_accessed=2 * bulk_n * itemsize),
        # Free win when the caller can donate x (same shape/dtype in & out).
        input_output_aliases=({0: 0} if donate else {}),
    )(x2d)

    out_flat = out2d.reshape(-1)
    if tail:
        tail_out = (jnp.clip(x_flat[bulk_n:] + 3.0, 0.0, 6.0) / 6.0).astype(dtype)
        out_flat = jnp.concatenate([out_flat, tail_out])
    return out_flat.reshape(orig_shape)


def hard_sigmoid_ref(x):
    return jnp.clip(x + 3.0, 0.0, 6.0) / 6.0


if __name__ == "__main__":
    key = jax.random.PRNGKey(0)
    # NCHW, same convention the PyTorch module receives.
    x = jax.random.normal(key, (2, 4, 16, 16), dtype=jnp.float32) * 4.0

    y = jax.block_until_ready(hard_sigmoid_pallas(x))
    y_ref = hard_sigmoid_ref(x)
    assert y.shape == x.shape and y.dtype == x.dtype
    assert jnp.allclose(y, y_ref, atol=1e-6), "f32 mismatch vs reference"

    # bf16 path: math stays in bf16, sublane minimum (16) respected in layout.
    xb = x.astype(jnp.bfloat16)
    yb = jax.block_until_ready(hard_sigmoid_pallas(xb))
    assert yb.shape == xb.shape and yb.dtype == jnp.bfloat16
    assert jnp.allclose(yb.astype(jnp.float32),
                        hard_sigmoid_ref(xb).astype(jnp.float32),
                        atol=2e-2), "bf16 mismatch vs reference"

    # Odd element count exercises the bulk + tiny-tail split path.
    xo = jax.random.normal(jax.random.PRNGKey(1), (3, 5, 7, 7),
                           dtype=jnp.float32) * 4.0
    yo = jax.block_until_ready(hard_sigmoid_pallas(xo))
    assert jnp.allclose(yo, hard_sigmoid_ref(xo), atol=1e-6), "tail-path mismatch"

    # Larger input exercises the multi-step (and even-count on v7x) grid.
    xl = jax.random.normal(jax.random.PRNGKey(2), (8, 64, 64, 64),
                           dtype=jnp.float32)
    yl = jax.block_until_ready(hard_sigmoid_pallas(xl))
    assert jnp.allclose(yl, hard_sigmoid_ref(xl), atol=1e-6), "multi-block mismatch"

    print("KERNEL_OK")
</pallas_src>

<mosaic_0001>
module attributes {stable_mosaic.version = 11 : i64} {
  func.func @_hard_sigmoid_kernel(%arg0: i32, %arg1: memref<1x2048xf32, #tpu.memory_space<vmem>>, %arg2: memref<1x2048xf32, #tpu.memory_space<vmem>>) attributes {dimension_semantics = [#tpu.dimension_semantics<parallel>], iteration_bounds = array<i64: 1>, scalar_prefetch = 0 : i64, scratch_operands = 0 : i64, tpu.core_type = #tpu.core_type<tc>, window_params = [{transform_indices = @transform_0, window_bounds = array<i64: 1, 2048>}, {transform_indices = @transform_1, window_bounds = array<i64: 1, 2048>}]} {
    %c0 = arith.constant 0 : index
    %c0_0 = arith.constant 0 : index
    %0 = vector.load %arg1[%c0, %c0_0] : memref<1x2048xf32, #tpu.memory_space<vmem>>, vector<1x2048xf32>
    %cst = arith.constant 3.000000e+00 : f32
    %1 = vector.broadcast %cst : f32 to vector<1x2048xf32>
    %2 = arith.addf %0, %1 : vector<1x2048xf32>
    %cst_1 = arith.constant 0.000000e+00 : f32
    %cst_2 = arith.constant 6.000000e+00 : f32
    %3 = vector.broadcast %cst_1 : f32 to vector<1x2048xf32>
    %4 = arith.maximumf %3, %2 : vector<1x2048xf32>
    %5 = vector.broadcast %cst_2 : f32 to vector<1x2048xf32>
    %6 = arith.minimumf %5, %4 : vector<1x2048xf32>
    %cst_3 = arith.constant 6.000000e+00 : f32
    %7 = vector.broadcast %cst_3 : f32 to vector<1x2048xf32>
    %8 = arith.divf %6, %7 : vector<1x2048xf32>
    %c0_4 = arith.constant 0 : index
    %c0_5 = arith.constant 0 : index
    %9 = vector.load %arg2[%c0_4, %c0_5] : memref<1x2048xf32, #tpu.memory_space<vmem>>, vector<1x2048xf32>
    tpu.vector_store %arg2[%c0_4, %c0_5], %8 {strides = array<i32>} : memref<1x2048xf32, #tpu.memory_space<vmem>>, vector<1x2048xf32>,
    return
  }
  func.func @transform_0(%arg0: i32) -> (i32, i32) {
    %c0_i32 = arith.constant 0 : i32
    %c0_i32_0 = arith.constant 0 : i32
    return %arg0, %c0_i32 : i32, i32
  }
  func.func @transform_1(%arg0: i32) -> (i32, i32) {
    %c0_i32 = arith.constant 0 : i32
    %c0_i32_0 = arith.constant 0 : i32
    return %arg0, %c0_i32 : i32, i32
  }
}

</mosaic_0001>

<llo_original>
// kernel: tpu_custom_call.1
$region0: #{tpu_custom_call.1}
  #allocation0 [shape = 'u32[]', space=smem, size = 0x4, offset = 0x4, fixed_abs, tag = 'smem constant byte address 0x4 - core index']
  #allocation1 [shape = 'u32[144,128]{1,0:T(1,128)}', space=vmem, size = 0x12000, scoped, tag = 'internal scratch']
  %s0 = inlined_call_operand.hbm [shape: f32[1,2048], index: 0, kind: input, shape index: {}]
  %s1 = inlined_call_operand.hbm [shape: f32[1,2048], index: 1, kind: output, shape index: {}]
  %s2 = sld [smem:[#allocation0]]
  $region18: #{tpu_custom_call.1} parent=0
    _
  %s4 = ssub.s32 1, %s2
  %s5 = scalar_select 0, %s4, %s2
  $region1: #{tpu_custom_call.1} parent=0
    #allocation2 [shape = 'u8[8192]{0}', space=vmem, size = 0x2000, scoped, tag = 'input window, operand 0, single buffered']
    #allocation3 [shape = 's32[1]{0}', space=sflag, size = 0x4, scoped, tag = 'scoped memory for tpu_custom_call.1']
    #allocation4 [shape = 's32[1]{0}', space=sflag, size = 0x4, scoped, tag = 'scoped memory for tpu_custom_call.1']
    #allocation5 [shape = 'u8[8192]{0}', space=vmem, size = 0x2000, scoped, tag = 'output window, operand 0, single buffered']
    %6 = vsyncpa [#allocation3], 0
    %7 = vsyncpa [#allocation4], 0
    // Predicated region
    $region2: #{tpu_custom_call.1} parent=1 // pred_check
      _
    $region3: #{tpu_custom_call.1} parent=1 // pred_check_branch
      %9 = sbr.rel (0) target = $region5
    $region4: #{tpu_custom_call.1} parent=1 // pred_region
      %s11 = ssub.s32 256, 256
      %12 = vsyncadd [#allocation3], %s11
      %s14 = sshll.u32 [#allocation2], 4
      %s15 = int_to_ptr.vmem [resolvable:$true] %s14
      %17 = dma.hbm_to_vmem [thread:$0]  %s0, 256, %s15, [#allocation3]
    $region5: #{tpu_custom_call.1} parent=1 // pred_fallthru
      _
    // Predicated region
    $region6: #{tpu_custom_call.1} parent=1 // pred_check
      _
    $region7: #{tpu_custom_call.1} parent=1 // pred_check_branch
      %19 = sbr.rel (0) target = $region9
    $region8: #{tpu_custom_call.1} parent=1 // pred_region
      %20 = dma.done [#allocation3], 256
    $region9: #{tpu_custom_call.1} parent=1 // pred_fallthru
      _
    %v21 = vld [vmem:[#allocation2] sm:$0xff]
    %v22 = vld [vmem:[#allocation2 + $0x8] sm:$0xff]
    %v23 = vadd.f32 %v21, 3.0
    %v24 = vadd.f32 %v22, 3.0
    %v25 = vmax.f32 %v23, 0.0
    %v26 = vmax.f32 %v24, 0.0
    %v27 = vmin.f32 %v25, 6.0
    %v28 = vmin.f32 %v26, 6.0
    %v29 = vrcp.pop 6.0
    %v30 = vmul.f32 %v27, %v29
    %v31 = vmul.f32 %v28, %v29
    %32 = vst [vmem:[#allocation5] sm:$0xff] %v30
    %33 = vst [vmem:[#allocation5 + $0x8] sm:$0xff] %v31
    // Predicated region
    $region10: #{tpu_custom_call.1} parent=1 // pred_check
      _
    $region11: #{tpu_custom_call.1} parent=1 // pred_check_branch
      %35 = sbr.rel (0) target = $region13
    $region12: #{tpu_custom_call.1} parent=1 // pred_region
      %s37 = ssub.s32 256, 256
      %38 = vsyncadd [#allocation4], %s37
      %s40 = sshll.u32 [#allocation5], 4
      %s41 = int_to_ptr.vmem [resolvable:$true] %s40
      %43 = dma.vmem_to_hbm [thread:$0]  %s41, 256, %s1, [#allocation4]
    $region13: #{tpu_custom_call.1} parent=1 // pred_fallthru
      _
    // Predicated region
    $region14: #{tpu_custom_call.1} parent=1 // pred_check
      _
    $region15: #{tpu_custom_call.1} parent=1 // pred_check_branch
      %45 = sbr.rel (0) target = $region17
    $region16: #{tpu_custom_call.1} parent=1 // pred_region
      %46 = dma.done [#allocation4], 256
    $region17: #{tpu_custom_call.1} parent=1 // pred_fallthru
      _
    %47 = vsyncpa [#allocation3], 1
    %48 = vsyncpa [#allocation4], 1

</llo_original>
